<compile_context>
chip_gen: v5e
topology: v5e:2x2
jax: 0.10.0
libtpu: 0.0.40
codegen_flags: <defaults>
</compile_context>

<pallas_src>
import math
import numpy as np
import jax
import jax.numpy as jnp
from jax.experimental import pallas as pl
from jax.experimental.pallas import tpu as pltpu


def _cdiv(a, b):
    return -(-a // b)


def _round_up(a, b):
    return _cdiv(a, b) * b


def decoder_kernel(x_ref, w_ref, b_ref, o_ref):
    # In-kernel bf16 cast of the activation tile, bf16 x bf16 matmul with
    # f32 accumulation on the MXU.
    x = x_ref[...].astype(jnp.bfloat16)
    acc = jnp.dot(x, w_ref[...], preferred_element_type=jnp.float32)
    # f32 epilogue: bias add (VPU) + tanh (EUP), then narrowing store.
    o_ref[...] = jnp.tanh(acc + b_ref[...]).astype(o_ref.dtype)


def decoder_forward(x, w, b, *, tb=1024, out_dtype=jnp.bfloat16):
    """y = tanh(x @ w + b).

    x: (B, 64) f32   activations (cast to bf16 inside the kernel)
    w: (64, 784)     weight, ideally already bf16 (cast hoisted to init time)
    b: (1, 784) f32  bias
    out: (B, 784) in `out_dtype` (default bf16; pass jnp.float32 for strict
         dtype parity with the PyTorch module).
    """
    B, D = x.shape
    N = w.shape[1]

    if w.dtype != jnp.bfloat16:
        w = w.astype(jnp.bfloat16)  # one-time fallback; hoist to param init

    # Batch tile: sublane-aligned, capped at `tb`, and chosen so the grid has
    # >= 2 steps whenever possible (v7x megacore).  Ragged final tile is
    # handled by Pallas, so no padding / output slicing is needed.
    if B <= 8:
        TB = B  # one full-array block; always a legal block shape
    else:
        TB = max(8, min(tb, _round_up(_cdiv(B, 2), 8)))
    grid = (_cdiv(B, TB),)

    cost = pl.CostEstimate(
        flops=2 * B * D * N,
        transcendentals=B * N,
        bytes_accessed=(x.size * x.dtype.itemsize
                        + w.size * w.dtype.itemsize
                        + b.size * b.dtype.itemsize
                        + B * N * jnp.dtype(out_dtype).itemsize),
    )

    return pl.pallas_call(
        decoder_kernel,
        out_shape=jax.ShapeDtypeStruct((B, N), out_dtype),
        grid=grid,
        in_specs=[
            pl.BlockSpec((TB, D), lambda i: (i, 0)),   # x tile (pipelined)
            pl.BlockSpec((D, N), lambda i: (0, 0)),    # weight, VMEM-resident
            pl.BlockSpec((1, N), lambda i: (0, 0)),    # bias,   VMEM-resident
        ],
        out_specs=pl.BlockSpec((TB, N), lambda i: (i, 0)),
        compiler_params=pltpu.CompilerParams(
            dimension_semantics=("parallel",)),
        cost_estimate=cost,
    )(x, w, b)


if __name__ == "__main__":
    B, IN, OUT = 2, 64, 784

    key = jax.random.PRNGKey(0)
    kw, kb, kx = jax.random.split(key, 3)

    # Deterministic synthetic nn.Linear(64, 784) params (stored transposed).
    bound = 1.0 / math.sqrt(IN)
    w = jax.random.uniform(kw, (IN, OUT), jnp.float32, -bound, bound)
    b = jax.random.uniform(kb, (1, OUT), jnp.float32, -bound, bound)
    x = jax.random.normal(kx, (B, IN), jnp.float32)

    # Hoist the weight bf16 cast to "parameter init" time (once per model,
    # not once per forward call).
    w_bf = w.astype(jnp.bfloat16)

    y = decoder_forward(x, w_bf, b)
    jax.block_until_ready(y)

    # Reference in f32; bf16 matmul inputs + bf16 output => loose tolerance.
    ref = jnp.tanh(x @ w + b)
    assert y.shape == (B, OUT)
    np.testing.assert_allclose(np.asarray(y, dtype=np.float32),
                               np.asarray(ref),
                               rtol=2e-2, atol=2e-2)
    print("KERNEL_OK")
</pallas_src>

<mosaic_0001>
module attributes {stable_mosaic.version = 11 : i64} {
  func.func @decoder_kernel(%arg0: i32, %arg1: memref<2x64xf32, #tpu.memory_space<vmem>>, %arg2: memref<64x784xbf16, #tpu.memory_space<vmem>>, %arg3: memref<1x784xf32, #tpu.memory_space<vmem>>, %arg4: memref<2x784xbf16, #tpu.memory_space<vmem>>) attributes {dimension_semantics = [#tpu.dimension_semantics<parallel>], iteration_bounds = array<i64: 1>, scalar_prefetch = 0 : i64, scratch_operands = 0 : i64, tpu.core_type = #tpu.core_type<tc>, window_params = [{transform_indices = @transform_0, window_bounds = array<i64: 2, 64>}, {pipeline_mode = #tpu.pipeline_mode<synchronous>, transform_indices = @transform_1, window_bounds = array<i64: 64, 784>}, {pipeline_mode = #tpu.pipeline_mode<synchronous>, transform_indices = @transform_2, window_bounds = array<i64: 1, 784>}, {transform_indices = @transform_3, window_bounds = array<i64: 2, 784>}]} {
    %c0 = arith.constant 0 : index
    %c0_0 = arith.constant 0 : index
    %0 = vector.load %arg1[%c0, %c0_0] : memref<2x64xf32, #tpu.memory_space<vmem>>, vector<2x64xf32>
    %1 = arith.truncf %0 : vector<2x64xf32> to vector<2x64xbf16>
    %c0_1 = arith.constant 0 : index
    %c0_2 = arith.constant 0 : index
    %2 = vector.load %arg2[%c0_1, %c0_2] : memref<64x784xbf16, #tpu.memory_space<vmem>>, vector<64x784xbf16>
    %cst = arith.constant dense<0.000000e+00> : vector<2x784xf32>
    %3 = tpu.matmul %1, %2, %cst {dimension_numbers = #tpu.dot_dimension_numbers<[1], [0], [0], [1], [0, 0, 1, 1], [], []>} : vector<2x64xbf16>, vector<64x784xbf16>, vector<2x784xf32> -> vector<2x784xf32>
    %c0_3 = arith.constant 0 : index
    %c0_4 = arith.constant 0 : index
    %4 = vector.load %arg3[%c0_3, %c0_4] : memref<1x784xf32, #tpu.memory_space<vmem>>, vector<1x784xf32>
    %5 = vector.broadcast %4 : vector<1x784xf32> to vector<2x784xf32>
    %6 = arith.addf %3, %5 : vector<2x784xf32>
    %7 = math.tanh %6 : vector<2x784xf32>
    %8 = arith.truncf %7 : vector<2x784xf32> to vector<2x784xbf16>
    %c0_5 = arith.constant 0 : index
    %c0_6 = arith.constant 0 : index
    %9 = vector.load %arg4[%c0_5, %c0_6] : memref<2x784xbf16, #tpu.memory_space<vmem>>, vector<2x784xbf16>
    tpu.vector_store %arg4[%c0_5, %c0_6], %8 {strides = array<i32>} : memref<2x784xbf16, #tpu.memory_space<vmem>>, vector<2x784xbf16>,
    return
  }
  func.func @transform_0(%arg0: i32) -> (i32, i32) {
    %c0_i32 = arith.constant 0 : i32
    %c0_i32_0 = arith.constant 0 : i32
    return %arg0, %c0_i32 : i32, i32
  }
  func.func @transform_1(%arg0: i32) -> (i32, i32) {
    %c0_i32 = arith.constant 0 : i32
    %c0_i32_0 = arith.constant 0 : i32
    %c0_i32_1 = arith.constant 0 : i32
    return %c0_i32, %c0_i32_0 : i32, i32
  }
  func.func @transform_2(%arg0: i32) -> (i32, i32) {
    %c0_i32 = arith.constant 0 : i32
    %c0_i32_0 = arith.constant 0 : i32
    %c0_i32_1 = arith.constant 0 : i32
    return %c0_i32, %c0_i32_0 : i32, i32
  }
  func.func @transform_3(%arg0: i32) -> (i32, i32) {
    %c0_i32 = arith.constant 0 : i32
    %c0_i32_0 = arith.constant 0 : i32
    return %arg0, %c0_i32 : i32, i32
  }
}

</mosaic_0001>

<llo_original>
// kernel: tpu_custom_call.1
$region0: #{tpu_custom_call.1}
  #allocation0 [shape = 'u32[]', space=smem, size = 0x4, offset = 0x4, fixed_abs, tag = 'smem constant byte address 0x4 - core index']
  #allocation1 [shape = 'u32[72,128]{1,0:T(1,128)}', space=vmem, size = 0x9000, scoped, tag = 'internal scratch']
  %s0 = inlined_call_operand.hbm [shape: f32[2,64], index: 0, kind: input, shape index: {}]
  %s1 = inlined_call_operand.hbm [shape: bf16[64,784], index: 1, kind: input, shape index: {}]
  %s2 = inlined_call_operand.hbm [shape: f32[1,784], index: 2, kind: input, shape index: {}]
  %s3 = inlined_call_operand.hbm [shape: bf16[2,784], index: 3, kind: output, shape index: {}]
  %s4 = sld [smem:[#allocation0]]
  $region34: #{tpu_custom_call.1} parent=0
    _
  %s6 = ssub.s32 1, %s4
  %s7 = scalar_select 0, %s6, %s4
  $region1: #{tpu_custom_call.1} parent=0
    #allocation2 [shape = 'u8[1024]{0}', space=vmem, size = 0x400, scoped, tag = 'input window, operand 0, single buffered']
    #allocation3 [shape = 's32[1]{0}', space=sflag, size = 0x4, scoped, tag = 'scoped memory for tpu_custom_call.1']
    #allocation4 [shape = 's32[1]{0}', space=sflag, size = 0x4, scoped, tag = 'scoped memory for tpu_custom_call.1']
    #allocation5 [shape = 'u8[114688]{0}', space=vmem, size = 0x1c000, scoped, tag = 'input window, operand 1, single buffered']
    #allocation6 [shape = 's32[1]{0}', space=sflag, size = 0x4, scoped, tag = 'scoped memory for tpu_custom_call.1']
    #allocation7 [shape = 'u8[3584]{0}', space=vmem, size = 0x1000, scoped, tag = 'input window, operand 2, single buffered']
    #allocation8 [shape = 'u8[3584]{0}', space=vmem, size = 0x1000, scoped, tag = 'output window, operand 0, single buffered']
    %8 = vsyncpa [#allocation3], 0
    %9 = vsyncpa [#allocation6], 0
    %10 = vsyncpa [#allocation4], 0
    // Predicated region
    $region2: #{tpu_custom_call.1} parent=1 // pred_check
      _
    $region3: #{tpu_custom_call.1} parent=1 // pred_check_branch
      %12 = sbr.rel (0) target = $region5
    $region4: #{tpu_custom_call.1} parent=1 // pred_region
      %14 = vsyncadd [#allocation3], 0
      %s16 = sshll.u32 %s0, 4
      %s17 = int_to_ptr.hbm [resolvable:$true] %s16
      %s18 = sshll.u32 [#allocation2], 4
      %s19 = int_to_ptr.vmem [resolvable:$true] %s18
      %21 = dma.hbm_to_vmem [thread:$0]  %s17, 32, %s19, [#allocation3]
    $region5: #{tpu_custom_call.1} parent=1 // pred_fallthru
      _
    // Predicated region
    $region6: #{tpu_custom_call.1} parent=1 // pred_check
      _
    $region7: #{tpu_custom_call.1} parent=1 // pred_check_branch
      %23 = sbr.rel (0) target = $region9
    $region8: #{tpu_custom_call.1} parent=1 // pred_region
      %25 = vsyncadd [#allocation6], 0
      %s26 = sshll.u32 %s1, 4
      %s27 = int_to_ptr.hbm [resolvable:$true] %s26
      %s28 = sshll.u32 [#allocation5], 4
      %s29 = int_to_ptr.vmem [resolvable:$true] %s28
      %34 = dma.hbm_to_vmem [thread:$0]  %s27, 3584, %s29, [#allocation6], 448, 448, 28
    $region9: #{tpu_custom_call.1} parent=1 // pred_fallthru
      _
    // Predicated region
    $region10: #{tpu_custom_call.1} parent=1 // pred_check
      _
    $region11: #{tpu_custom_call.1} parent=1 // pred_check_branch
      %36 = sbr.rel (0) target = $region13
    $region12: #{tpu_custom_call.1} parent=1 // pred_region
      %38 = vsyncadd [#allocation6], 0
      %s40 = sshll.u32 %s2, 4
      %s41 = int_to_ptr.hbm [resolvable:$true] %s40
      %s42 = sshll.u32 [#allocation7], 4
      %s43 = int_to_ptr.vmem [resolvable:$true] %s42
      %45 = dma.hbm_to_vmem [thread:$0]  %s41, 112, %s43, [#allocation6]
    $region13: #{tpu_custom_call.1} parent=1 // pred_fallthru
      _
    // Predicated region
    $region14: #{tpu_custom_call.1} parent=1 // pred_check
      _
    $region15: #{tpu_custom_call.1} parent=1 // pred_check_branch
      %47 = sbr.rel (0) target = $region17
    $region16: #{tpu_custom_call.1} parent=1 // pred_region
      %49 = dma.done [#allocation3], 32
    $region17: #{tpu_custom_call.1} parent=1 // pred_fallthru
      _
    // Predicated region
    $region18: #{tpu_custom_call.1} parent=1 // pred_check
      _
    $region19: #{tpu_custom_call.1} parent=1 // pred_check_branch
      %51 = sbr.rel (0) target = $region21
    $region20: #{tpu_custom_call.1} parent=1 // pred_region
      %53 = dma.done [#allocation6], 3584
    $region21: #{tpu_custom_call.1} parent=1 // pred_fallthru
      _
    // Predicated region
    $region22: #{tpu_custom_call.1} parent=1 // pred_check
      _
    $region23: #{tpu_custom_call.1} parent=1 // pred_check_branch
      %55 = sbr.rel (0) target = $region25
    $region24: #{tpu_custom_call.1} parent=1 // pred_region
      %57 = dma.done [#allocation6], 112
    $region25: #{tpu_custom_call.1} parent=1 // pred_fallthru
      _
    %v59 = vld [vmem:[#allocation2] sm:$0x3]
    %v60 = vpack.c.bf16 %v59, %v59
    %v61 = vld [vmem:[#allocation5] sm:$0xff]
    %v62 = vld [vmem:[#allocation5 + $0x8] sm:$0xff]
    %v63 = vld [vmem:[#allocation5 + $0x10] sm:$0xff]
    %v64 = vld [vmem:[#allocation5 + $0x18] sm:$0xf]
    %v65 = vld [vmem:[#allocation5 + $0x1c] sm:$0xff]
    %v66 = vld [vmem:[#allocation5 + $0x24] sm:$0xff]
    %v67 = vld [vmem:[#allocation5 + $0x2c] sm:$0xff]
    %v68 = vld [vmem:[#allocation5 + $0x34] sm:$0xf]
    %v69 = vld [vmem:[#allocation5 + $0x38] sm:$0xff]
    %v70 = vld [vmem:[#allocation5 + $0x40] sm:$0xff]
    %v71 = vld [vmem:[#allocation5 + $0x48] sm:$0xff]
    %v72 = vld [vmem:[#allocation5 + $0x50] sm:$0xf]
    %v73 = vld [vmem:[#allocation5 + $0x54] sm:$0xff]
    %v74 = vld [vmem:[#allocation5 + $0x5c] sm:$0xff]
    %v75 = vld [vmem:[#allocation5 + $0x64] sm:$0xff]
    %v76 = vld [vmem:[#allocation5 + $0x6c] sm:$0xf]
    %v77 = vld [vmem:[#allocation5 + $0x70] sm:$0xff]
    %v78 = vld [vmem:[#allocation5 + $0x78] sm:$0xff]
    %v79 = vld [vmem:[#allocation5 + $0x80] sm:$0xff]
    %v80 = vld [vmem:[#allocation5 + $0x88] sm:$0xf]
    %v81 = vld [vmem:[#allocation5 + $0x8c] sm:$0xff]
    %v82 = vld [vmem:[#allocation5 + $0x94] sm:$0xff]
    %v83 = vld [vmem:[#allocation5 + $0x9c] sm:$0xff]
    %v84 = vld [vmem:[#allocation5 + $0xa4] sm:$0xf]
    %v85 = vld [vmem:[#allocation5 + $0xa8] sm:$0xff]
    %v86 = vld [vmem:[#allocation5 + $0xb0] sm:$0xff]
    %v87 = vld [vmem:[#allocation5 + $0xb8] sm:$0xff]
    %v88 = vld [vmem:[#allocation5 + $0xc0] sm:$0xf]
    %v89 = vld [vmem:[#allocation5 + $0xc4] sm:$0xff]
    %v90 = vld [vmem:[#allocation5 + $0xcc] sm:$0xff]
    %v91 = vld [vmem:[#allocation5 + $0xd4] sm:$0xff]
    %v92 = vld [vmem:[#allocation5 + $0xdc] sm:$0xf]
    %v93 = vld [vmem:[#allocation7] sm:$0x7f]
    %v95 = vperm.slane %v93, 0
    %v96 = vperm.slane %v93, 1
    %v97 = vperm.slane %v93, 2
    %v98 = vperm.slane %v93, 3
    %v99 = vperm.slane %v93, 4
    %v100 = vperm.slane %v93, 5
    %v101 = vperm.slane %v93, 6
    %v141 = vunpack.c.l.b16 %v61
    %v142 = vunpack.c.h.b16 %v61
    %v143 = vunpack.c.l.b16 %v62
    %v144 = vunpack.c.h.b16 %v62
    %v145 = vunpack.c.l.b16 %v63
    %v146 = vunpack.c.h.b16 %v63
    %v147 = vunpack.c.l.b16 %v64
    %v148 = vunpack.c.l.b16 %v65
    %v149 = vunpack.c.h.b16 %v65
    %v150 = vunpack.c.l.b16 %v66
    %v151 = vunpack.c.h.b16 %v66
    %v152 = vunpack.c.l.b16 %v67
    %v153 = vunpack.c.h.b16 %v67
    %v154 = vunpack.c.l.b16 %v68
    %v155 = vunpack.c.l.b16 %v69
    %v156 = vunpack.c.h.b16 %v69
    %v157 = vunpack.c.l.b16 %v70
    %v158 = vunpack.c.h.b16 %v70
    %v159 = vunpack.c.l.b16 %v71
    %v160 = vunpack.c.h.b16 %v71
    %v161 = vunpack.c.l.b16 %v72
    %v162 = vunpack.c.l.b16 %v73
    %v163 = vunpack.c.h.b16 %v73
    %v164 = vunpack.c.l.b16 %v74
    %v165 = vunpack.c.h.b16 %v74
    %v166 = vunpack.c.l.b16 %v75
    %v167 = vunpack.c.h.b16 %v75
    %v168 = vunpack.c.l.b16 %v76
    %v169 = vunpack.c.l.b16 %v77
    %v170 = vunpack.c.h.b16 %v77
    %v171 = vunpack.c.l.b16 %v78
    %v172 = vunpack.c.h.b16 %v78
    %v173 = vunpack.c.l.b16 %v79
    %v174 = vunpack.c.h.b16 %v79
    %v175 = vunpack.c.l.b16 %v80
    %v176 = vunpack.c.l.b16 %v81
    %v177 = vunpack.c.h.b16 %v81
    %v178 = vunpack.c.l.b16 %v82
    %v179 = vunpack.c.h.b16 %v82
    %v180 = vunpack.c.l.b16 %v83
    %v181 = vunpack.c.h.b16 %v83
    %v182 = vunpack.c.l.b16 %v84
    %v183 = vunpack.c.l.b16 %v85
    %v184 = vunpack.c.h.b16 %v85
    %v185 = vunpack.c.l.b16 %v86
    %v186 = vunpack.c.h.b16 %v86
    %v187 = vunpack.c.l.b16 %v87
    %v188 = vunpack.c.h.b16 %v87
    %v189 = vunpack.c.l.b16 %v88
    %v190 = vunpack.c.l.b16 %v89
    %v191 = vunpack.c.h.b16 %v89
    %v192 = vunpack.c.l.b16 %v90
    %v193 = vunpack.c.h.b16 %v90
    %v194 = vunpack.c.l.b16 %v91
    %v195 = vunpack.c.h.b16 %v91
    %v196 = vunpack.c.l.b16 %v92
    %v197 = vpack.c.b16 %v148, %v141
    %v198 = vpack.c.b16 %v149, %v142
    %v199 = vpack.c.b16 %v150, %v143
    %v200 = vpack.c.b16 %v151, %v144
    %v201 = vpack.c.b16 %v152, %v145
    %v202 = vpack.c.b16 %v153, %v146
    %v203 = vpack.c.b16 %v154, %v147
    %v204 = vpack.c.b16 %v162, %v155
    %v205 = vpack.c.b16 %v163, %v156
    %v206 = vpack.c.b16 %v164, %v157
    %v207 = vpack.c.b16 %v165, %v158
    %v208 = vpack.c.b16 %v166, %v159
    %v209 = vpack.c.b16 %v167, %v160
    %v210 = vpack.c.b16 %v168, %v161
    %v211 = vpack.c.b16 %v176, %v169
    %v212 = vpack.c.b16 %v177, %v170
    %v213 = vpack.c.b16 %v178, %v171
    %v214 = vpack.c.b16 %v179, %v172
    %v215 = vpack.c.b16 %v180, %v173
    %v216 = vpack.c.b16 %v181, %v174
    %v217 = vpack.c.b16 %v182, %v175
    %v218 = vpack.c.b16 %v190, %v183
    %v219 = vpack.c.b16 %v191, %v184
    %v220 = vpack.c.b16 %v192, %v185
    %v221 = vpack.c.b16 %v193, %v186
    %v222 = vpack.c.b16 %v194, %v187
    %v223 = vpack.c.b16 %v195, %v188
    %v224 = vpack.c.b16 %v196, %v189
    %vm253 = vcmask 523264
    %v255 = vsel %vm253, %v60, 0
    %257 = vmatpush.bf16.msra.mxu0 0
    %258 = vmatpush.bf16.msra.mxu0 0
    %259 = vmatpush.bf16.msra.mxu0 0
    %260 = vmatpush.bf16.msra.mxu0 0
    %261 = vmatpush.bf16.msra.mxu0 %v218
    %262 = vmatpush.bf16.msra.mxu0 %v211
    %263 = vmatpush.bf16.msra.mxu0 %v204
    %264 = vmatpush.bf16.msra.mxu0 %v197
    %265 = vmatmul.bf16.gmra.mxu0 %v255
    %v266 = vpop.f32.mrf.mxu0
    %v267 = vadd.f32 %v95, %v266
    %v268 = vpop.f32.mrf.mxu0
    %269 = vdwg.mxu0
    %270 = vmatpush.bf16.msra.mxu0 0
    %271 = vmatpush.bf16.msra.mxu0 0
    %272 = vmatpush.bf16.msra.mxu0 0
    %273 = vmatpush.bf16.msra.mxu0 0
    %274 = vmatpush.bf16.msra.mxu0 %v219
    %275 = vmatpush.bf16.msra.mxu0 %v212
    %276 = vmatpush.bf16.msra.mxu0 %v205
    %277 = vmatpush.bf16.msra.mxu0 %v198
    %278 = vmatmul.bf16.gmra.mxu0 %v255
    %v279 = vpop.f32.mrf.mxu0
    %v280 = vadd.f32 %v96, %v279
    %v281 = vpop.f32.mrf.mxu0
    %282 = vdwg.mxu0
    %283 = vmatpush.bf16.msra.mxu0 0
    %284 = vmatpush.bf16.msra.mxu0 0
    %285 = vmatpush.bf16.msra.mxu0 0
    %286 = vmatpush.bf16.msra.mxu0 0
    %287 = vmatpush.bf16.msra.mxu0 %v220
    %288 = vmatpush.bf16.msra.mxu0 %v213
    %289 = vmatpush.bf16.msra.mxu0 %v206
    %290 = vmatpush.bf16.msra.mxu0 %v199
    %291 = vmatmul.bf16.gmra.mxu0 %v255
    %v292 = vpop.f32.mrf.mxu0
    %v293 = vadd.f32 %v97, %v292
    %v294 = vpop.f32.mrf.mxu0
    %295 = vdwg.mxu0
    %296 = vmatpush.bf16.msra.mxu0 0
    %297 = vmatpush.bf16.msra.mxu0 0
    %298 = vmatpush.bf16.msra.mxu0 0
    %299 = vmatpush.bf16.msra.mxu0 0
    %300 = vmatpush.bf16.msra.mxu0 %v221
    %301 = vmatpush.bf16.msra.mxu0 %v214
    %302 = vmatpush.bf16.msra.mxu0 %v207
    %303 = vmatpush.bf16.msra.mxu0 %v200
    %304 = vmatmul.bf16.gmra.mxu0 %v255
    %v305 = vpop.f32.mrf.mxu0
    %v306 = vadd.f32 %v98, %v305
    %v307 = vpop.f32.mrf.mxu0
    %308 = vdwg.mxu0
    %309 = vmatpush.bf16.msra.mxu0 0
    %310 = vmatpush.bf16.msra.mxu0 0
    %311 = vmatpush.bf16.msra.mxu0 0
    %312 = vmatpush.bf16.msra.mxu0 0
    %313 = vmatpush.bf16.msra.mxu0 %v222
    %314 = vmatpush.bf16.msra.mxu0 %v215
    %315 = vmatpush.bf16.msra.mxu0 %v208
    %316 = vmatpush.bf16.msra.mxu0 %v201
    %317 = vmatmul.bf16.gmra.mxu0 %v255
    %v318 = vpop.f32.mrf.mxu0
    %v319 = vadd.f32 %v99, %v318
    %v320 = vpop.f32.mrf.mxu0
    %321 = vdwg.mxu0
    %322 = vmatpush.bf16.msra.mxu0 0
    %323 = vmatpush.bf16.msra.mxu0 0
    %324 = vmatpush.bf16.msra.mxu0 0
    %325 = vmatpush.bf16.msra.mxu0 0
    %326 = vmatpush.bf16.msra.mxu0 %v223
    %327 = vmatpush.bf16.msra.mxu0 %v216
    %328 = vmatpush.bf16.msra.mxu0 %v209
    %329 = vmatpush.bf16.msra.mxu0 %v202
    %330 = vmatmul.bf16.gmra.mxu0 %v255
    %v331 = vpop.f32.mrf.mxu0
    %v332 = vadd.f32 %v100, %v331
    %v333 = vpop.f32.mrf.mxu0
    %334 = vdwg.mxu0
    %335 = vmatpush.bf16.msra.mxu0 0
    %336 = vmatpush.bf16.msra.mxu0 0
    %337 = vmatpush.bf16.msra.mxu0 0
    %338 = vmatpush.bf16.msra.mxu0 0
    %339 = vmatpush.bf16.msra.mxu0 %v224
    %340 = vmatpush.bf16.msra.mxu0 %v217
    %341 = vmatpush.bf16.msra.mxu0 %v210
    %342 = vmatpush.bf16.msra.mxu0 %v203
    %343 = vmatmul.bf16.gmra.mxu0 %v255
    %v344 = vpop.f32.mrf.mxu0
    %v345 = vadd.f32 %v101, %v344
    %v346 = vpop.f32.mrf.mxu0
    %347 = vdwg.mxu0
    %v348 = vtanh.pop %v267
    %v349 = vtanh.pop %v280
    %v350 = vtanh.pop %v293
    %v351 = vtanh.pop %v306
    %v352 = vtanh.pop %v319
    %v353 = vtanh.pop %v332
    %v354 = vtanh.pop %v345
    %v355 = vpack.c.bf16 %v349, %v348
    %v356 = vpack.c.bf16 %v351, %v350
    %v357 = vpack.c.bf16 %v353, %v352
    %v358 = vpack.c.bf16 %v354, %v354
    %v363 = vrot.slane %v355, 3
    %v364 = vrot.slane %v356, 6
    %v365 = vrot.slane %v356, 1
    %v366 = vrot.slane %v357, 4
    %v367 = vrot.slane %v357, 7
    %v368 = vrot.slane %v358, 2
    %v369 = vrot.slane %v358, 5
    %vm370 = vcmask 1040384
    %v373 = vsel %vm370, %v355, %v363
    %vm374 = vcmask 1042434
    %v377 = vsel %vm374, %v364, %v365
    %vm378 = vcmask 1041408
    %v379 = vsel %vm378, %v373, %v377
    %vm380 = vcmask 1044484
    %v383 = vsel %vm380, %v366, %v367
    %vm384 = vcmask 1046534
    %v387 = vsel %vm384, %v368, %v369
    %vm388 = vcmask 1045508
    %v389 = vsel %vm388, %v383, %v387
    %vm390 = vcmask 1043456
    %v391 = vsel %vm390, %v379, %v389
    %vm393 = vcmask 1041409
    %vm394 = vmor %vm393, %vm370
    %vm395 = vmor %vm374, %vm394
    %vm396 = vcmask 1043459
    %vm397 = vmor %vm396, %vm395
    %vm398 = vmor %vm380, %vm397
    %vm399 = vcmask 1045509
    %vm400 = vmor %vm399, %vm398
    %vm401 = vcmask 129030
    %vm402 = vmor %vm401, %vm400
    %403 = vst.msk [vmem:[#allocation8] sm:$0x7f] %vm402, %v391
    // Predicated region
    $region26: #{tpu_custom_call.1} parent=1 // pred_check
      _
    $region27: #{tpu_custom_call.1} parent=1 // pred_check_branch
      %405 = sbr.rel (0) target = $region29
    $region28: #{tpu_custom_call.1} parent=1 // pred_region
      %407 = vsyncadd [#allocation4], 0
      %s409 = sshll.u32 [#allocation8], 4
      %s410 = int_to_ptr.vmem [resolvable:$true] %s409
      %s411 = sshll.u32 %s3, 4
      %s412 = int_to_ptr.hbm [resolvable:$true] %s411
      %414 = dma.vmem_to_hbm [thread:$0]  %s410, 112, %s412, [#allocation4]
    $region29: #{tpu_custom_call.1} parent=1 // pred_fallthru
      _
    // Predicated region
    $region30: #{tpu_custom_call.1} parent=1 // pred_check
      _
    $region31: #{tpu_custom_call.1} parent=1 // pred_check_branch
      %416 = sbr.rel (0) target = $region33
    $region32: #{tpu_custom_call.1} parent=1 // pred_region
      %418 = dma.done [#allocation4], 112
    $region33: #{tpu_custom_call.1} parent=1 // pred_fallthru
      _
    %419 = vsyncpa [#allocation3], 1
    %420 = vsyncpa [#allocation6], 1
    %421 = vsyncpa [#allocation4], 1

</llo_original>
